<compile_context>
chip_gen: v5e
topology: v5e:2x2
jax: 0.10.0
libtpu: 0.0.40
codegen_flags: <defaults>
</compile_context>

<pallas_src>
import functools

import jax
import jax.numpy as jnp
from jax.experimental import pallas as pl
from jax.experimental.pallas import tpu as pltpu


def _pow_gamma(x, gamma):
    """x ** gamma for x >= 0; avoids EUP log/exp for small integer gamma."""
    g = float(gamma)
    if g == 0.0:
        return jnp.ones_like(x)
    if g.is_integer() and 1.0 <= g <= 4.0:
        out = x
        for _ in range(int(g) - 1):
            out = out * x
        return out
    return x ** jnp.float32(g)


def _tile_loss(logits_ref, tgt_ref, *, gamma, C, S, TR, need_mask):
    """Focal CE loss for one (1, C, TR, 128) logits block -> (TR, 128) f32."""
    tgt = tgt_ref[0, 0]                                    # (TR, 128) int32

    # Running max over the C class slabs (dense (TR,128) vregs, pure VPU).
    m = logits_ref[0, 0].astype(jnp.float32)
    for c in range(1, C):
        m = jnp.maximum(m, logits_ref[0, c].astype(jnp.float32))

    # exp-sum + target-class gather in one unrolled pass over C.
    # TODO(synk): class-tile (K grid axis with running max / exp-sum scratch)
    # for very large C instead of a fully unrolled loop.
    s = jnp.zeros_like(m)
    tgt_logit = jnp.zeros_like(m)
    for c in range(C):
        x_c = logits_ref[0, c].astype(jnp.float32)
        s = s + jnp.exp(x_c - m)
        tgt_logit = tgt_logit + jnp.where(tgt == c, x_c, 0.0)

    # log(pt) in log-space: finite even when pt underflows in softmax space.
    log_pt = tgt_logit - (m + jnp.log(s))                  # <= 0
    pt = jnp.exp(log_pt)
    one_minus_pt = jnp.maximum(1.0 - pt, 0.0)              # clamp fp noise at pt~1
    loss = -_pow_gamma(one_minus_pt, gamma) * log_pt       # (TR, 128)

    if need_mask:
        # Zero the spatial padding (S -> R*128) and any Pallas block overhang.
        row = pl.program_id(1) * TR + jax.lax.broadcasted_iota(
            jnp.int32, (TR, 128), 0)
        lane = jax.lax.broadcasted_iota(jnp.int32, (TR, 128), 1)
        loss = jnp.where(row * 128 + lane < S, loss, 0.0)
    return loss


def _focal_ce_partial_kernel(logits_ref, tgt_ref, out_ref, *,
                             gamma, C, S, TR, need_mask):
    loss = _tile_loss(logits_ref, tgt_ref, gamma=gamma, C=C, S=S, TR=TR,
                      need_mask=need_mask)
    row_sum = jnp.sum(loss, axis=0, keepdims=True)         # (1, 128)
    sub = jax.lax.broadcasted_iota(jnp.int32, (8, 128), 0)
    # Per-tile partial in sublane 0 of a lane-dense (8,128) block; no carry.
    out_ref[...] = jnp.where(sub == 0, row_sum, 0.0).reshape(out_ref.shape)


def _focal_ce_elementwise_kernel(logits_ref, tgt_ref, out_ref, *,
                                 gamma, C, S, TR):
    # Padded / overhang pixels are sliced off in the wrapper -> no mask needed.
    loss = _tile_loss(logits_ref, tgt_ref, gamma=gamma, C=C, S=S, TR=TR,
                      need_mask=False)
    out_ref[...] = loss.reshape(out_ref.shape)


def cross_entropy_focal_loss(logits, target, *, alpha=None, gamma=0.2,
                             reduction='mean'):
    """logits: (N, C, H, W) float; target: (N, 1, H, W) int class indices."""
    if alpha is not None:
        # TODO(synk): per-class alpha weighting (alpha.gather(0, target)) not
        # implemented (module default is alpha=None).
        raise NotImplementedError("alpha weighting not implemented")

    N, C, H, W = logits.shape
    S = H * W
    itemsize = jnp.dtype(logits.dtype).itemsize

    # Per-generation budgets: bigger steps on 128-MiB-VMEM parts (v5e/v6e),
    # conservative on v7x (64 MiB physical) or unknown hardware.
    try:
        vmem_cap = int(getattr(pltpu.get_tpu_info(), "vmem_capacity_bytes", 0)
                       or 0)
    except Exception:
        vmem_cap = 0
    if vmem_cap >= 100 * 2**20:
        step_budget, vmem_limit = 4 * 2**20, 64 * 2**20
    else:
        step_budget, vmem_limit = 2 * 2**20, 32 * 2**20

    # 2D spatial layout: lane axis = 128 pixels, sublane axis = spatial rows.
    S_pad = pl.cdiv(S, 128) * 128
    R = S_pad // 128

    x = logits.reshape(N, C, S)
    t = target.reshape(N, 1, S).astype(jnp.int32)
    if S_pad != S:
        x = jnp.pad(x, ((0, 0), (0, 0), (0, S_pad - S)))
        t = jnp.pad(t, ((0, 0), (0, 0), (0, S_pad - S)))
    x = x.reshape(N, C, R, 128)
    t = t.reshape(N, 1, R, 128)

    # Rows-per-step sized from the *dense* block bytes (logits + int32 target).
    bytes_per_row = 128 * (C * itemsize + 4)
    tr = max(8, (step_budget // bytes_per_row) // 8 * 8)
    TR = R if R <= tr else tr                  # full dim or a multiple of 8
    num_j = pl.cdiv(R, TR)

    # Raise the scoped limit from actual block bytes (double-buffered inputs +
    # f32 temporaries headroom) so large-C blocks don't overflow it silently.
    step_bytes = TR * bytes_per_row
    vmem_limit = max(vmem_limit,
                     min(2 * step_bytes + 10 * TR * 128 * 4 + 2 * 2**20,
                         112 * 2**20))

    grid = (N, num_j)
    in_specs = [
        pl.BlockSpec((1, C, TR, 128), lambda n, j: (n, 0, j, 0)),
        pl.BlockSpec((1, 1, TR, 128), lambda n, j: (n, 0, j, 0)),
    ]
    need_mask = (S_pad != S) or (R % TR != 0)

    if reduction in ('mean', 'sum'):
        kernel = functools.partial(
            _focal_ce_partial_kernel, gamma=gamma, C=C, S=S, TR=TR,
            need_mask=need_mask)
        partials = pl.pallas_call(
            kernel,
            out_shape=jax.ShapeDtypeStruct((N, num_j, 8, 128), jnp.float32),
            grid_spec=pltpu.PrefetchScalarGridSpec(
                num_scalar_prefetch=0,
                grid=grid,
                in_specs=in_specs,
                out_specs=pl.BlockSpec((1, 1, 8, 128),
                                       lambda n, j: (n, j, 0, 0)),
            ),
            compiler_params=pltpu.CompilerParams(
                dimension_semantics=("parallel", "parallel"),
                vmem_limit_bytes=int(vmem_limit)),
        )(x, t)
        total = jnp.sum(partials)
        if reduction == 'mean':
            return total / jnp.float32(N * S)
        return total
    elif reduction == 'none':
        kernel = functools.partial(
            _focal_ce_elementwise_kernel, gamma=gamma, C=C, S=S, TR=TR)
        loss = pl.pallas_call(
            kernel,
            out_shape=jax.ShapeDtypeStruct((N, R, 128), jnp.float32),
            grid_spec=pltpu.PrefetchScalarGridSpec(
                num_scalar_prefetch=0,
                grid=grid,
                in_specs=in_specs,
                out_specs=pl.BlockSpec((1, TR, 128), lambda n, j: (n, j, 0)),
            ),
            compiler_params=pltpu.CompilerParams(
                dimension_semantics=("parallel", "parallel"),
                vmem_limit_bytes=int(vmem_limit)),
        )(x, t)
        # Matches torch's .view(-1) order (n-major, then h, then w).
        return loss.reshape(N, R * 128)[:, :S].reshape(-1)
    else:
        raise ValueError(f"unknown reduction: {reduction}")


def _reference(logits, target, gamma=0.2, reduction='mean'):
    # Pure-JAX reference mirroring the PyTorch module.
    p = jax.nn.softmax(logits.astype(jnp.float32), axis=1)
    pt = jnp.take_along_axis(p, target, axis=1).reshape(-1)
    log_pt = jnp.log(pt)
    loss = -1.0 * (1.0 - pt) ** gamma * log_pt
    if reduction == 'mean':
        return loss.mean()
    elif reduction == 'sum':
        return loss.sum()
    return loss


if __name__ == "__main__":
    key = jax.random.PRNGKey(0)
    k1, k2, k3, k4 = jax.random.split(key, 4)

    # Case 1: S = 256 (divisible by 128, no padding / no mask path).
    N, C, H, W = 2, 4, 16, 16
    logits = jax.random.normal(k1, (N, C, H, W), dtype=jnp.float32)
    target = jax.random.randint(k2, (N, 1, H, W), 0, C, dtype=jnp.int32)
    for red in ('mean', 'sum', 'none'):
        out = jax.block_until_ready(
            cross_entropy_focal_loss(logits, target, gamma=0.2, reduction=red))
        ref = _reference(logits, target, gamma=0.2, reduction=red)
        assert jnp.allclose(out, ref, rtol=1e-5, atol=1e-5), (red, out, ref)

    # Case 2: S = 100 (padding + in-kernel mask path).
    N2, C2, H2, W2 = 2, 3, 10, 10
    logits2 = jax.random.normal(k3, (N2, C2, H2, W2), dtype=jnp.float32)
    target2 = jax.random.randint(k4, (N2, 1, H2, W2), 0, C2, dtype=jnp.int32)
    for red in ('mean', 'none'):
        out = jax.block_until_ready(
            cross_entropy_focal_loss(logits2, target2, gamma=0.2,
                                     reduction=red))
        ref = _reference(logits2, target2, gamma=0.2, reduction=red)
        assert jnp.allclose(out, ref, rtol=1e-5, atol=1e-5), (red, out, ref)

    print("KERNEL_OK")
</pallas_src>

<mosaic_0001>
module attributes {stable_mosaic.version = 11 : i64} {
  func.func @_focal_ce_partial_kernel(%arg0: i32, %arg1: i32, %arg2: memref<1x4x2x128xf32, #tpu.memory_space<vmem>>, %arg3: memref<1x1x2x128xi32, #tpu.memory_space<vmem>>, %arg4: memref<1x1x8x128xf32, #tpu.memory_space<vmem>>) attributes {dimension_semantics = [#tpu.dimension_semantics<parallel>, #tpu.dimension_semantics<parallel>], iteration_bounds = array<i64: 2, 1>, scalar_prefetch = 0 : i64, scratch_operands = 0 : i64, tpu.core_type = #tpu.core_type<tc>, window_params = [{transform_indices = @transform_0, window_bounds = array<i64: 1, 4, 2, 128>}, {transform_indices = @transform_1, window_bounds = array<i64: 1, 1, 2, 128>}, {transform_indices = @transform_2, window_bounds = array<i64: 1, 1, 8, 128>}]} {
    %c0 = arith.constant 0 : index
    %c0_0 = arith.constant 0 : index
    %c0_1 = arith.constant 0 : index
    %c0_2 = arith.constant 0 : index
    %0 = vector.load %arg3[%c0, %c0_0, %c0_1, %c0_2] : memref<1x1x2x128xi32, #tpu.memory_space<vmem>>, vector<1x1x2x128xi32>
    %1 = vector.shape_cast %0 : vector<1x1x2x128xi32> to vector<2x128xi32>
    %c0_3 = arith.constant 0 : index
    %c0_4 = arith.constant 0 : index
    %c0_5 = arith.constant 0 : index
    %c0_6 = arith.constant 0 : index
    %2 = vector.load %arg2[%c0_3, %c0_4, %c0_5, %c0_6] : memref<1x4x2x128xf32, #tpu.memory_space<vmem>>, vector<1x1x2x128xf32>
    %3 = vector.shape_cast %2 : vector<1x1x2x128xf32> to vector<2x128xf32>
    %c0_7 = arith.constant 0 : index
    %c1 = arith.constant 1 : index
    %c0_8 = arith.constant 0 : index
    %c0_9 = arith.constant 0 : index
    %4 = vector.load %arg2[%c0_7, %c1, %c0_8, %c0_9] : memref<1x4x2x128xf32, #tpu.memory_space<vmem>>, vector<1x1x2x128xf32>
    %5 = vector.shape_cast %4 : vector<1x1x2x128xf32> to vector<2x128xf32>
    %6 = arith.maximumf %3, %5 : vector<2x128xf32>
    %c0_10 = arith.constant 0 : index
    %c2 = arith.constant 2 : index
    %c0_11 = arith.constant 0 : index
    %c0_12 = arith.constant 0 : index
    %7 = vector.load %arg2[%c0_10, %c2, %c0_11, %c0_12] : memref<1x4x2x128xf32, #tpu.memory_space<vmem>>, vector<1x1x2x128xf32>
    %8 = vector.shape_cast %7 : vector<1x1x2x128xf32> to vector<2x128xf32>
    %9 = arith.maximumf %6, %8 : vector<2x128xf32>
    %c0_13 = arith.constant 0 : index
    %c3 = arith.constant 3 : index
    %c0_14 = arith.constant 0 : index
    %c0_15 = arith.constant 0 : index
    %10 = vector.load %arg2[%c0_13, %c3, %c0_14, %c0_15] : memref<1x4x2x128xf32, #tpu.memory_space<vmem>>, vector<1x1x2x128xf32>
    %11 = vector.shape_cast %10 : vector<1x1x2x128xf32> to vector<2x128xf32>
    %12 = arith.maximumf %9, %11 : vector<2x128xf32>
    %cst = arith.constant 0.000000e+00 : f32
    %13 = vector.broadcast %cst : f32 to vector<2x128xf32>
    %cst_16 = arith.constant 0.000000e+00 : f32
    %14 = vector.broadcast %cst_16 : f32 to vector<2x128xf32>
    %c0_17 = arith.constant 0 : index
    %c0_18 = arith.constant 0 : index
    %c0_19 = arith.constant 0 : index
    %c0_20 = arith.constant 0 : index
    %15 = vector.load %arg2[%c0_17, %c0_18, %c0_19, %c0_20] : memref<1x4x2x128xf32, #tpu.memory_space<vmem>>, vector<1x1x2x128xf32>
    %16 = vector.shape_cast %15 : vector<1x1x2x128xf32> to vector<2x128xf32>
    %17 = arith.subf %16, %12 : vector<2x128xf32>
    %18 = math.exp %17 : vector<2x128xf32>
    %19 = arith.addf %13, %18 : vector<2x128xf32>
    %c0_i32 = arith.constant 0 : i32
    %20 = vector.broadcast %c0_i32 : i32 to vector<2x128xi32>
    %21 = arith.cmpi eq, %1, %20 : vector<2x128xi32>
    %cst_21 = arith.constant 0.000000e+00 : f32
    %22 = vector.broadcast %cst_21 : f32 to vector<2x128xf32>
    %23 = arith.select %21, %16, %22 : vector<2x128xi1>, vector<2x128xf32>
    %24 = arith.addf %14, %23 : vector<2x128xf32>
    %c0_22 = arith.constant 0 : index
    %c1_23 = arith.constant 1 : index
    %c0_24 = arith.constant 0 : index
    %c0_25 = arith.constant 0 : index
    %25 = vector.load %arg2[%c0_22, %c1_23, %c0_24, %c0_25] : memref<1x4x2x128xf32, #tpu.memory_space<vmem>>, vector<1x1x2x128xf32>
    %26 = vector.shape_cast %25 : vector<1x1x2x128xf32> to vector<2x128xf32>
    %27 = arith.subf %26, %12 : vector<2x128xf32>
    %28 = math.exp %27 : vector<2x128xf32>
    %29 = arith.addf %19, %28 : vector<2x128xf32>
    %c1_i32 = arith.constant 1 : i32
    %30 = vector.broadcast %c1_i32 : i32 to vector<2x128xi32>
    %31 = arith.cmpi eq, %1, %30 : vector<2x128xi32>
    %cst_26 = arith.constant 0.000000e+00 : f32
    %32 = vector.broadcast %cst_26 : f32 to vector<2x128xf32>
    %33 = arith.select %31, %26, %32 : vector<2x128xi1>, vector<2x128xf32>
    %34 = arith.addf %24, %33 : vector<2x128xf32>
    %c0_27 = arith.constant 0 : index
    %c2_28 = arith.constant 2 : index
    %c0_29 = arith.constant 0 : index
    %c0_30 = arith.constant 0 : index
    %35 = vector.load %arg2[%c0_27, %c2_28, %c0_29, %c0_30] : memref<1x4x2x128xf32, #tpu.memory_space<vmem>>, vector<1x1x2x128xf32>
    %36 = vector.shape_cast %35 : vector<1x1x2x128xf32> to vector<2x128xf32>
    %37 = arith.subf %36, %12 : vector<2x128xf32>
    %38 = math.exp %37 : vector<2x128xf32>
    %39 = arith.addf %29, %38 : vector<2x128xf32>
    %c2_i32 = arith.constant 2 : i32
    %40 = vector.broadcast %c2_i32 : i32 to vector<2x128xi32>
    %41 = arith.cmpi eq, %1, %40 : vector<2x128xi32>
    %cst_31 = arith.constant 0.000000e+00 : f32
    %42 = vector.broadcast %cst_31 : f32 to vector<2x128xf32>
    %43 = arith.select %41, %36, %42 : vector<2x128xi1>, vector<2x128xf32>
    %44 = arith.addf %34, %43 : vector<2x128xf32>
    %c0_32 = arith.constant 0 : index
    %c3_33 = arith.constant 3 : index
    %c0_34 = arith.constant 0 : index
    %c0_35 = arith.constant 0 : index
    %45 = vector.load %arg2[%c0_32, %c3_33, %c0_34, %c0_35] : memref<1x4x2x128xf32, #tpu.memory_space<vmem>>, vector<1x1x2x128xf32>
    %46 = vector.shape_cast %45 : vector<1x1x2x128xf32> to vector<2x128xf32>
    %47 = arith.subf %46, %12 : vector<2x128xf32>
    %48 = math.exp %47 : vector<2x128xf32>
    %49 = arith.addf %39, %48 : vector<2x128xf32>
    %c3_i32 = arith.constant 3 : i32
    %50 = vector.broadcast %c3_i32 : i32 to vector<2x128xi32>
    %51 = arith.cmpi eq, %1, %50 : vector<2x128xi32>
    %cst_36 = arith.constant 0.000000e+00 : f32
    %52 = vector.broadcast %cst_36 : f32 to vector<2x128xf32>
    %53 = arith.select %51, %46, %52 : vector<2x128xi1>, vector<2x128xf32>
    %54 = arith.addf %44, %53 : vector<2x128xf32>
    %55 = math.log %49 : vector<2x128xf32>
    %56 = arith.addf %12, %55 : vector<2x128xf32>
    %57 = arith.subf %54, %56 : vector<2x128xf32>
    %58 = math.exp %57 : vector<2x128xf32>
    %cst_37 = arith.constant 1.000000e+00 : f32
    %59 = vector.broadcast %cst_37 : f32 to vector<2x128xf32>
    %60 = arith.subf %59, %58 : vector<2x128xf32>
    %cst_38 = arith.constant 0.000000e+00 : f32
    %61 = vector.broadcast %cst_38 : f32 to vector<2x128xf32>
    %62 = arith.maximumf %60, %61 : vector<2x128xf32>
    %cst_39 = arith.constant 2.000000e-01 : f32
    %63 = vector.broadcast %cst_39 : f32 to vector<2x128xf32>
    %64 = math.powf %62, %63 : vector<2x128xf32>
    %cst_40 = arith.constant 0.000000e+00 : f32
    %65 = vector.broadcast %cst_40 : f32 to vector<2x128xf32>
    %66 = arith.subf %65, %64 : vector<2x128xf32>
    %67 = arith.mulf %66, %57 : vector<2x128xf32>
    %cst_41 = arith.constant dense<0.000000e+00> : vector<128xf32>
    %68 = vector.multi_reduction <add>, %67, %cst_41 [0] : vector<2x128xf32> to vector<128xf32>
    %69 = vector.shape_cast %68 : vector<128xf32> to vector<1x128xf32>
    %70 = tpu.iota {dimensions = array<i32: 0>} : vector<8x128xi32>
    %c0_i32_42 = arith.constant 0 : i32
    %71 = vector.broadcast %c0_i32_42 : i32 to vector<8x128xi32>
    %72 = arith.cmpi eq, %70, %71 : vector<8x128xi32>
    %cst_43 = arith.constant 0.000000e+00 : f32
    %73 = vector.shape_cast %69 : vector<1x128xf32> to vector<1x128xf32>
    %74 = vector.broadcast %73 : vector<1x128xf32> to vector<8x128xf32>
    %75 = vector.broadcast %cst_43 : f32 to vector<8x128xf32>
    %76 = arith.select %72, %74, %75 : vector<8x128xi1>, vector<8x128xf32>
    %77 = vector.shape_cast %76 : vector<8x128xf32> to vector<1x1x8x128xf32>
    %c0_44 = arith.constant 0 : index
    %c0_45 = arith.constant 0 : index
    %c0_46 = arith.constant 0 : index
    %c0_47 = arith.constant 0 : index
    %78 = vector.load %arg4[%c0_44, %c0_45, %c0_46, %c0_47] : memref<1x1x8x128xf32, #tpu.memory_space<vmem>>, vector<1x1x8x128xf32>
    tpu.vector_store %arg4[%c0_44, %c0_45, %c0_46, %c0_47], %77 {strides = array<i32>} : memref<1x1x8x128xf32, #tpu.memory_space<vmem>>, vector<1x1x8x128xf32>,
    return
  }
  func.func @transform_0(%arg0: i32, %arg1: i32) -> (i32, i32, i32, i32) {
    %c0_i32 = arith.constant 0 : i32
    %c0_i32_0 = arith.constant 0 : i32
    %c0_i32_1 = arith.constant 0 : i32
    return %arg0, %c0_i32, %arg1, %c0_i32_0 : i32, i32, i32, i32
  }
  func.func @transform_1(%arg0: i32, %arg1: i32) -> (i32, i32, i32, i32) {
    %c0_i32 = arith.constant 0 : i32
    %c0_i32_0 = arith.constant 0 : i32
    %c0_i32_1 = arith.constant 0 : i32
    return %arg0, %c0_i32, %arg1, %c0_i32_0 : i32, i32, i32, i32
  }
  func.func @transform_2(%arg0: i32, %arg1: i32) -> (i32, i32, i32, i32) {
    %c0_i32 = arith.constant 0 : i32
    %c0_i32_0 = arith.constant 0 : i32
    %c0_i32_1 = arith.constant 0 : i32
    return %arg0, %arg1, %c0_i32, %c0_i32_0 : i32, i32, i32, i32
  }
}

</mosaic_0001>

<llo_original>
// kernel: tpu_custom_call.1
$region0: #{tpu_custom_call.1}
  #allocation0 [shape = 'u32[]', space=smem, size = 0x4, offset = 0x4, fixed_abs, tag = 'smem constant byte address 0x4 - core index']
  #allocation1 [shape = 'u32[72,128]{1,0:T(1,128)}', space=vmem, size = 0x9000, scoped, tag = 'internal scratch']
  %s0 = inlined_call_operand.hbm [shape: f32[2,4,2,128], index: 0, kind: input, shape index: {}]
  %s1 = inlined_call_operand.hbm [shape: s32[2,1,2,128], index: 1, kind: input, shape index: {}]
  %s2 = inlined_call_operand.hbm [shape: f32[2,1,8,128], index: 2, kind: output, shape index: {}]
  %s3 = sld [smem:[#allocation0]]
  $region49: #{tpu_custom_call.1} parent=0
    _
  %s5 = ssub.s32 1, %s3
  %s6 = scalar_select 0, %s5, %s3
  $region1: #{tpu_custom_call.1} parent=0
    #allocation2 [shape = 'u8[8192]{0}', space=vmem, size = 0x2000, scoped, tag = 'input window, operand 0']
    #allocation3 [shape = 's32[2]{0}', space=sflag, size = 0x8, scoped, tag = 'scoped memory for tpu_custom_call.1']
    #allocation4 [shape = 's32[2]{0}', space=sflag, size = 0x8, scoped, tag = 'scoped memory for tpu_custom_call.1']
    #allocation5 [shape = 'u8[2048]{0}', space=vmem, size = 0x800, scoped, tag = 'input window, operand 1']
    #allocation6 [shape = 's32[2]{0}', space=sflag, size = 0x8, scoped, tag = 'scoped memory for tpu_custom_call.1']
    #allocation7 [shape = 'u8[8192]{0}', space=vmem, size = 0x2000, scoped, tag = 'output window, operand 0']
    %7 = vsyncpa [#allocation3], 0
    %s8 = scalar_lea.sflag [#allocation3], 1
    %9 = vsyncpa %s8, 0
    %10 = vsyncpa [#allocation6], 0
    %s11 = scalar_lea.sflag [#allocation6], 1
    %12 = vsyncpa %s11, 0
    %13 = vsyncpa [#allocation4], 0
    %s14 = scalar_lea.sflag [#allocation4], 1
    %15 = vsyncpa %s14, 0
    loop: start=0, step=1, limit=4
    $region2: #{tpu_custom_call.1} parent=1 // loop_pre_header
      _
    $region3: #{tpu_custom_call.1} parent=1 // loop_header
      %s17 = sphi 0, %s21
      %p18 = scmp.ge.s32.totalorder %s17, 4
      %s24 = sphi 0, %s36
      %s25 = sphi 0, %s32
      %s26 = sphi 0, %s24
      %s27 = sphi 0, %s25
      %s28 = sphi 0, %s26
      %s29 = sphi 0, %s27
      %s41 = sphi 0, %s43
      %s44 = sphi 0, %s41
      %s45 = sphi 0, %s44
      %s61 = sphi 0, %s45
      %s69 = sphi 0, %s71
      %s72 = sphi 0, %s69
      %s73 = sphi 0, %s72
      %s89 = sphi 0, %s73
      %s97 = sphi 0, %s99
      %s100 = sphi 0, %s97
      %s101 = sphi 0, %s100
      %s117 = sphi 0, %s101
    $region4: #{tpu_custom_call.1} parent=1 // loop_header_branch
      %20 = sbr.rel (%p18) target = $region8
    $region5: #{tpu_custom_call.1} parent=1 // loop_body
      %s22 = ssub.s32 %s17, 1
      %s23 = ssub.s32 %s17, 2
      %s30 = sadd.s32 1, %s25
      %p31 = scmp.ge.s32.totalorder %s30, 1
      %s32 = scalar_select %p31, 0, %s30
      %s33 = sadd.s32 1, %s24
      %s34 = scalar_select %p31, %s33, %s24
      %p35 = scmp.ge.s32.totalorder %s34, 2
      %s36 = scalar_select %p35, 0, %s34
      %s37 = ssub.s32 %s24, %s36
      %s38 = ssub.s32 %s25, %s32
      %s39 = sor.u32 %s37, %s38
      %p40 = scmp.eq.s32.totalorder %s39, 0
      %s42 = sadd.s32 %s41, 1
      %s43 = scalar_select %p40, %s41, %s42
      %p46 = pneg %p40
      %p47 = scmp.eq.s32.totalorder %s17, 1
      %p48 = por %p46, %p47
      %p49 = scmp.ne.s32.totalorder %s41, %s44
      %p50 = scmp.eq.s32.totalorder %s17, 0
      %p51 = por %p49, %p50
      %p52 = scmp.ne.s32.totalorder %s41, %s44
      %p53 = scmp.eq.s32.totalorder %s22, 1
      %p54 = por %p52, %p53
      %p55 = scmp.ne.s32.totalorder %s44, %s45
      %p56 = scmp.eq.s32.totalorder %s22, 0
      %p57 = por %p55, %p56
      %p58 = scmp.ne.s32.totalorder %s44, %s45
      %p59 = scmp.eq.s32.totalorder %s23, 1
      %p60 = por %p58, %p59
      %p62 = scmp.ne.s32.totalorder %s45, %s61
      %p63 = scmp.eq.s32.totalorder %s23, 0
      %p64 = por %p62, %p63
      %s65 = ssub.s32 %s24, %s36
      %s66 = ssub.s32 %s25, %s32
      %s67 = sor.u32 %s65, %s66
      %p68 = scmp.eq.s32.totalorder %s67, 0
      %s70 = sadd.s32 %s69, 1
      %s71 = scalar_select %p68, %s69, %s70
      %p74 = pneg %p68
      %p75 = scmp.eq.s32.totalorder %s17, 1
      %p76 = por %p74, %p75
      %p77 = scmp.ne.s32.totalorder %s69, %s72
      %p78 = scmp.eq.s32.totalorder %s17, 0
      %p79 = por %p77, %p78
      %p80 = scmp.ne.s32.totalorder %s69, %s72
      %p81 = scmp.eq.s32.totalorder %s22, 1
      %p82 = por %p80, %p81
      %p83 = scmp.ne.s32.totalorder %s72, %s73
      %p84 = scmp.eq.s32.totalorder %s22, 0
      %p85 = por %p83, %p84
      %p86 = scmp.ne.s32.totalorder %s72, %s73
      %p87 = scmp.eq.s32.totalorder %s23, 1
      %p88 = por %p86, %p87
      %p90 = scmp.ne.s32.totalorder %s73, %s89
      %p91 = scmp.eq.s32.totalorder %s23, 0
      %p92 = por %p90, %p91
      %s93 = ssub.s32 %s24, %s36
      %s94 = ssub.s32 %s25, %s32
      %s95 = sor.u32 %s93, %s94
      %p96 = scmp.eq.s32.totalorder %s95, 0
      %s98 = sadd.s32 %s97, 1
      %s99 = scalar_select %p96, %s97, %s98
      %p102 = pneg %p96
      %p103 = scmp.eq.s32.totalorder %s17, 1
      %p104 = por %p102, %p103
      %p105 = scmp.ne.s32.totalorder %s97, %s100
      %p106 = scmp.eq.s32.totalorder %s17, 0
      %p107 = por %p105, %p106
      %p108 = scmp.ne.s32.totalorder %s97, %s100
      %p109 = scmp.eq.s32.totalorder %s22, 1
      %p110 = por %p108, %p109
      %p111 = scmp.ne.s32.totalorder %s100, %s101
      %p112 = scmp.eq.s32.totalorder %s22, 0
      %p113 = por %p111, %p112
      %p114 = scmp.ne.s32.totalorder %s100, %s101
      %p115 = scmp.eq.s32.totalorder %s23, 1
      %p116 = por %p114, %p115
      %p118 = scmp.ne.s32.totalorder %s101, %s117
      %p119 = scmp.eq.s32.totalorder %s23, 0
      %p120 = por %p118, %p119
      %p121 = scmp.le.s32.totalorder 1, %s17
      %p122 = scmp.lt.s32.totalorder %s17, 3
      %p123 = pnand %p121, %p122
      %p124 = pneg %p123
      // Predicated region
      $region9: #{tpu_custom_call.1} parent=5 // pred_check
        _
      $region10: #{tpu_custom_call.1} parent=5 // pred_check_branch
        %126 = sbr.rel (%p123) target = $region12
      $region11: #{tpu_custom_call.1} parent=5 // pred_region
        %s127 = ssub.s32 %s17, 1
      $region12: #{tpu_custom_call.1} parent=5 // pred_fallthru
        _
      %p128 = scmp.lt.s32.totalorder %s17, 2
      // Predicated region
      $region13: #{tpu_custom_call.1} parent=5 // pred_check
        %p129 = pneg %p128
      $region14: #{tpu_custom_call.1} parent=5 // pred_check_branch
        %131 = sbr.rel (%p129) target = $region16
      $region15: #{tpu_custom_call.1} parent=5 // pred_region
        // Predicated region
        $region17: #{tpu_custom_call.1} parent=15 // pred_check
          %p132 = pneg %p51
        $region18: #{tpu_custom_call.1} parent=15 // pred_check_branch
          %134 = sbr.rel (%p132) target = $region20
        $region19: #{tpu_custom_call.1} parent=15 // pred_region
          %s135 = sand.u32 %s41, 1
          %s136 = scalar_lea.sflag [#allocation3], %s135
          %s137 = sand.u32 %s41, 1
          %s138 = smul.addr %s137, 8
          %s139 = scalar_lea.vmem [#allocation2], %s138
          %141 = vsyncadd %s136, 0
          %s142 = smul.addr %s24, 4
          %s143 = sadd.s32 %s25, %s142
          %s144 = smul.addr %s143, 2
          %s145 = scalar_lea.hbm %s0, %s144
          %s146 = sshll.u32 %s145, 4
          %s147 = int_to_ptr.hbm [resolvable:$true] %s146
          %s148 = sshll.u32 %s139, 4
          %s149 = int_to_ptr.vmem [resolvable:$true] %s148
          %154 = dma.hbm_to_vmem [thread:$0]  %s147, 128, %s149, %s136, 32, 32, 2
        $region20: #{tpu_custom_call.1} parent=15 // pred_fallthru
          _
        // Predicated region
        $region21: #{tpu_custom_call.1} parent=15 // pred_check
          %p155 = pneg %p79
        $region22: #{tpu_custom_call.1} parent=15 // pred_check_branch
          %157 = sbr.rel (%p155) target = $region24
        $region23: #{tpu_custom_call.1} parent=15 // pred_region
          %s158 = sand.u32 %s69, 1
          %s159 = scalar_lea.sflag [#allocation6], %s158
          %s160 = sand.u32 %s69, 1
          %s161 = smul.addr %s160, 2
          %s162 = scalar_lea.vmem [#allocation5], %s161
          %164 = vsyncadd %s159, 0
          %s165 = sadd.s32 %s25, %s24
          %s166 = smul.addr %s165, 2
          %s167 = scalar_lea.hbm %s1, %s166
          %s169 = sshll.u32 %s167, 4
          %s170 = int_to_ptr.hbm [resolvable:$true] %s169
          %s171 = sshll.u32 %s162, 4
          %s172 = int_to_ptr.vmem [resolvable:$true] %s171
          %174 = dma.hbm_to_vmem [thread:$0]  %s170, 32, %s172, %s159
        $region24: #{tpu_custom_call.1} parent=15 // pred_fallthru
          _
      $region16: #{tpu_custom_call.1} parent=5 // pred_fallthru
        _
      %p175 = scmp.le.s32.totalorder 1, %s17
      %p176 = scmp.lt.s32.totalorder %s17, 3
      %p177 = pnand %p175, %p176
      %p178 = pneg %p177
      // Predicated region
      $region25: #{tpu_custom_call.1} parent=5 // pred_check
        _
      $region26: #{tpu_custom_call.1} parent=5 // pred_check_branch
        %180 = sbr.rel (%p177) target = $region28
      $region27: #{tpu_custom_call.1} parent=5 // pred_region
        %s181 = ssub.s32 %s17, 1
        %s182 = sand.u32 %s44, 1
        %s183 = scalar_lea.sflag [#allocation3], %s182
        %s184 = sand.u32 %s44, 1
        %s185 = smul.addr %s184, 8
        %s186 = scalar_lea.vmem [#allocation2], %s185
        // Predicated region
        $region29: #{tpu_custom_call.1} parent=27 // pred_check
          %p187 = pneg %p57
        $region30: #{tpu_custom_call.1} parent=27 // pred_check_branch
          %189 = sbr.rel (%p187) target = $region32
        $region31: #{tpu_custom_call.1} parent=27 // pred_region
          %191 = dma.done %s183, 128
        $region32: #{tpu_custom_call.1} parent=27 // pred_fallthru
          _
        %s192 = sand.u32 %s72, 1
        %s193 = scalar_lea.sflag [#allocation6], %s192
        %s194 = sand.u32 %s72, 1
        %s195 = smul.addr %s194, 2
        %s196 = scalar_lea.vmem [#allocation5], %s195
        // Predicated region
        $region33: #{tpu_custom_call.1} parent=27 // pred_check
          %p197 = pneg %p85
        $region34: #{tpu_custom_call.1} parent=27 // pred_check_branch
          %199 = sbr.rel (%p197) target = $region36
        $region35: #{tpu_custom_call.1} parent=27 // pred_region
          %201 = dma.done %s193, 32
        $region36: #{tpu_custom_call.1} parent=27 // pred_fallthru
          _
        %s202 = sand.u32 %s44, 1
        %s203 = scalar_lea.sflag [#allocation3], %s202
        %s204 = sand.u32 %s44, 1
        %s205 = smul.addr %s204, 8
        %s206 = scalar_lea.vmem [#allocation2], %s205
        %p207 = pneg %p57
        %p208 = pneg %p54
        %s209 = sand.u32 %s72, 1
        %s210 = scalar_lea.sflag [#allocation6], %s209
        %s211 = sand.u32 %s72, 1
        %s212 = smul.addr %s211, 2
        %s213 = scalar_lea.vmem [#allocation5], %s212
        %p214 = pneg %p85
        %p215 = pneg %p82
        %p216 = pneg %p113
        %p217 = pneg %p110
        %s218 = sand.u32 %s100, 1
        %s219 = scalar_lea.sflag [#allocation4], %s218
        %s220 = sand.u32 %s100, 1
        %s221 = smul.addr %s220, 8
        %s222 = scalar_lea.vmem [#allocation7], %s221
        %v223 = vld [vmem:[%s196] sm:$0x3]
        %v224 = vld [vmem:[%s186] sm:$0x3]
        %s225 = scalar_lea.vmem %s186, 2 [#allocation2]
        %v226 = vld [vmem:[%s225] sm:$0x3]
        %v227 = vmax.f32 %v224, %v226
        %s228 = scalar_lea.vmem %s186, 4 [#allocation2]
        %v229 = vld [vmem:[%s228] sm:$0x3]
        %v230 = vmax.f32 %v227, %v229
        %s231 = scalar_lea.vmem %s186, 6 [#allocation2]
        %v232 = vld [vmem:[%s231] sm:$0x3]
        %v233 = vmax.f32 %v230, %v232
        %v234 = vsub.f32 %v224, %v233
        %v235 = vmul.f32 %v234, 1.442695
        %v236 = vpow.pop %v235
        %v237 = vadd.f32 %v236, 0.0
        %vm238 = vcmp.eq.s32.totalorder %v223, 0
        %v239 = vsel %vm238, %v224, 0.0
        %v240 = vadd.f32 %v239, 0.0
        %v241 = vsub.f32 %v226, %v233
        %v242 = vmul.f32 %v241, 1.442695
        %v243 = vpow.pop %v242
        %v244 = vadd.f32 %v237, %v243
        %vm245 = vcmp.eq.s32.totalorder %v223, 1
        %v246 = vsel %vm245, %v226, 0.0
        %v247 = vadd.f32 %v240, %v246
        %v248 = vsub.f32 %v229, %v233
        %v249 = vmul.f32 %v248, 1.442695
        %v250 = vpow.pop %v249
        %v251 = vadd.f32 %v244, %v250
        %vm252 = vcmp.eq.s32.totalorder %v223, 2
        %v253 = vsel %vm252, %v229, 0.0
        %v254 = vadd.f32 %v247, %v253
        %v255 = vsub.f32 %v232, %v233
        %v256 = vmul.f32 %v255, 1.442695
        %v257 = vpow.pop %v256
        %v258 = vadd.f32 %v251, %v257
        %vm259 = vcmp.eq.s32.totalorder %v223, 3
        %v260 = vsel %vm259, %v232, 0.0
        %v261 = vadd.f32 %v254, %v260
        %v262 = vlog2.pop %v258
        %v263 = vmul.f32 %v262, 0.6931472
        %v264 = vadd.f32 %v233, %v263
        %v265 = vsub.f32 %v261, %v264
        %v266 = vmul.f32 %v265, 1.442695
        %v267 = vpow.pop %v266
        %v268 = vsub.f32 1.0, %v267
        %v269 = vmax.f32 %v268, 0.0
        %v270 = vpow.f32 %v269, 0.2
        %v271 = vsub.f32 0.0, %v270
        %v272 = vmul.f32 %v271, %v265
        %vm273 = vcmask 1041408
        %v274 = vsel %vm273, %v272, 0.0
        %v275 = vrot.slane %v274, 4
        %v276 = vadd.f32 %v274, %v275
        %v277 = vrot.slane %v276, 2
        %v278 = vadd.f32 %v276, %v277
        %v279 = vrot.slane %v278, 1
        %v280 = vadd.f32 %v278, %v279
        %v281 = vlaneseq
        %v282 = vshrl.u32 %v281, 7
        %vm283 = vcmp.eq.s32.totalorder %v282, 0
        %v284 = vsel %vm283, %v280, 0.0
        %285 = vst [vmem:[%s222] sm:$0xff] %v284
        %s286 = sand.u32 %s100, 1
        %s287 = scalar_lea.sflag [#allocation4], %s286
        %s288 = sand.u32 %s100, 1
        %s289 = smul.addr %s288, 8
        %s290 = scalar_lea.vmem [#allocation7], %s289
        // Predicated region
        $region37: #{tpu_custom_call.1} parent=27 // pred_check
          %p291 = pneg %p110
        $region38: #{tpu_custom_call.1} parent=27 // pred_check_branch
          %293 = sbr.rel (%p291) target = $region40
        $region39: #{tpu_custom_call.1} parent=27 // pred_region
          %295 = vsyncadd %s287, 0
          %s296 = sadd.s32 %s27, %s26
          %s297 = smul.addr %s296, 8
          %s298 = scalar_lea.hbm %s2, %s297
          %s300 = sshll.u32 %s290, 4
          %s301 = int_to_ptr.vmem [resolvable:$true] %s300
          %s302 = sshll.u32 %s298, 4
          %s303 = int_to_ptr.hbm [resolvable:$true] %s302
          %305 = dma.vmem_to_hbm [thread:$0]  %s301, 128, %s303, %s287
        $region40: #{tpu_custom_call.1} parent=27 // pred_fallthru
          _
      $region28: #{tpu_custom_call.1} parent=5 // pred_fallthru
        _
      %p306 = scmp.le.s32.totalorder 2, %s17
      // Predicated region
      $region41: #{tpu_custom_call.1} parent=5 // pred_check
        %p307 = pneg %p306
      $region42: #{tpu_custom_call.1} parent=5 // pred_check_branch
        %309 = sbr.rel (%p307) target = $region44
      $region43: #{tpu_custom_call.1} parent=5 // pred_region
        %s310 = ssub.s32 %s17, 2
        // Predicated region
        $region45: #{tpu_custom_call.1} parent=43 // pred_check
          %p311 = pneg %p116
        $region46: #{tpu_custom_call.1} parent=43 // pred_check_branch
          %313 = sbr.rel (%p311) target = $region48
        $region47: #{tpu_custom_call.1} parent=43 // pred_region
          %s314 = sand.u32 %s101, 1
          %s315 = scalar_lea.sflag [#allocation4], %s314
          %s316 = sand.u32 %s101, 1
          %s317 = smul.addr %s316, 8
          %s318 = scalar_lea.vmem [#allocation7], %s317
          %320 = dma.done %s315, 128
        $region48: #{tpu_custom_call.1} parent=43 // pred_fallthru
          _
      $region44: #{tpu_custom_call.1} parent=5 // pred_fallthru
        _
    $region6: #{tpu_custom_call.1} parent=1 // loop_footer
      %s21 = sadd.s32 1, %s17
    $region7: #{tpu_custom_call.1} parent=1 // loop_footer_branch
      %16 = sbr.rel target = $region3
    $region8: #{tpu_custom_call.1} parent=1 // loop_exit
      _
    %321 = vsyncpa [#allocation3], 1
    %s322 = scalar_lea.sflag [#allocation3], 1
    %323 = vsyncpa %s322, 1
    %324 = vsyncpa [#allocation6], 1
    %s325 = scalar_lea.sflag [#allocation6], 1
    %326 = vsyncpa %s325, 1
    %327 = vsyncpa [#allocation4], 1
    %s328 = scalar_lea.sflag [#allocation4], 1
    %329 = vsyncpa %s328, 1

</llo_original>
